<compile_context>
chip_gen: v5e
topology: v5e:2x2
jax: 0.10.0
libtpu: 0.0.40
codegen_flags: <defaults>
</compile_context>

<pallas_src>
import jax
import jax.numpy as jnp
from jax.experimental import pallas as pl
from jax.experimental.pallas import tpu as pltpu

LOG_STD_MIN = -20.0
LOG_STD_MAX = 2.0


def _actor_kernel(x_ref, w1_ref, w23_ref, b123_ref, wh_ref, bh_ref, out_ref):
    # x_ref:    (TILE_B, S) f32  (batch-major; transposed in-kernel)
    # w1_ref:   (H, S)   bf16    w23_ref: (2, H, H) bf16
    # b123_ref: (3, H, 1) f32    wh_ref:  (2A, H)  bf16   bh_ref: (2A, 1) f32
    # out_ref:  (2A, TILE_B) f32 -- rows [0, A) = mean, rows [A, 2A) = std
    x_bf = x_ref[...].astype(jnp.bfloat16)                      # (TILE_B, S)

    # Layer 1: w1 @ x^T  (transposed-RHS dot; q@k.T-style, XLU/MXU handles it)
    h = jnp.dot(w1_ref[...], x_bf.T,
                preferred_element_type=jnp.float32) + b123_ref[0]
    h = jnp.maximum(h, 0.0)
    h = jnp.dot(w23_ref[0], h.astype(jnp.bfloat16),
                preferred_element_type=jnp.float32) + b123_ref[1]
    h = jnp.maximum(h, 0.0)
    h = jnp.dot(w23_ref[1], h.astype(jnp.bfloat16),
                preferred_element_type=jnp.float32) + b123_ref[2]
    h = jnp.maximum(h, 0.0)

    # Both heads in a single MXU call: rows [0, A) mean, rows [A, 2A) log_std.
    heads = jnp.dot(wh_ref[...], h.astype(jnp.bfloat16),
                    preferred_element_type=jnp.float32) + bh_ref[...]

    a = heads.shape[0] // 2
    row = jax.lax.broadcasted_iota(jnp.int32, heads.shape, 0)
    # clamp+exp on the full slab: the extra exp on the mean rows rides the
    # otherwise-idle EUP slot and is discarded by the select below.
    std = jnp.exp(jnp.clip(heads, LOG_STD_MIN, LOG_STD_MAX))
    out_ref[...] = jnp.where(row >= a, std, heads).astype(out_ref.dtype)


def _round_up(x, m):
    return ((x + m - 1) // m) * m


def gaussian_actor_forward(state, params, *, tile_b=512):
    """state: (B, state_dim) f32 -> (mean, std), each (B, action_dim) f32."""
    w1, w23, b123, wh, bh = params
    B, S = state.shape
    A2 = wh.shape[0]
    A = A2 // 2

    # Batch tile: multiple of 256 (full 2x256x256 MXU passes on v6e/v7x; 128 is
    # enough on v5e). Large tiles amortize the ~0.35us per-grid-step overhead;
    # keep <=1024 so the live (H, TILE_B) activations stay within the vreg file.
    tile_b = max(256, (tile_b // 256) * 256)
    tile = min(tile_b, _round_up(B, 256))        # don't over-pad tiny batches
    b_pad = _round_up(B, tile)

    x = state if b_pad == B else jnp.pad(state, ((0, b_pad - B), (0, 0)))

    out_t = pl.pallas_call(
        _actor_kernel,
        out_shape=jax.ShapeDtypeStruct((A2, b_pad), jnp.float32),
        grid=(b_pad // tile,),
        in_specs=[
            pl.BlockSpec((tile, S), lambda i: (i, 0)),     # activations: tiled over batch
            pl.BlockSpec(w1.shape, lambda i: (0, 0)),      # weights: VMEM-resident
            pl.BlockSpec(w23.shape, lambda i: (0, 0, 0)),
            pl.BlockSpec(b123.shape, lambda i: (0, 0, 0)),
            pl.BlockSpec(wh.shape, lambda i: (0, 0)),
            pl.BlockSpec(bh.shape, lambda i: (0, 0)),
        ],
        out_specs=pl.BlockSpec((A2, tile), lambda i: (0, i)),
        compiler_params=pltpu.CompilerParams(
            dimension_semantics=("parallel",)),            # batch tiles shard across TCs on v7x
    )(x, w1, w23, b123, wh, bh)

    # TODO(synk): downstream consumers that accept the (A, B)-major slab can
    # skip these two transposes (each is a separate tiny XLA launch).
    mean = out_t[:A, :B].T
    std = out_t[A:, :B].T
    return mean, std


def _xavier_uniform(key, out_features, in_features):
    # Matches torch.nn.init.xavier_uniform_ (gain=1) on a (out, in) weight.
    limit = float(jnp.sqrt(6.0 / (in_features + out_features)))
    return jax.random.uniform(key, (out_features, in_features), jnp.float32,
                              -limit, limit)


def init_gaussian_actor_params(key, state_dim, action_dim, hidden_units=32):
    k1, k2, k3, k4, k5 = jax.random.split(key, 5)
    bf = jnp.bfloat16
    w1 = _xavier_uniform(k1, hidden_units, state_dim).astype(bf)           # (H, S)
    w2 = _xavier_uniform(k2, hidden_units, hidden_units).astype(bf)        # (H, H)
    w3 = _xavier_uniform(k3, hidden_units, hidden_units).astype(bf)        # (H, H)
    w_mean = _xavier_uniform(k4, action_dim, hidden_units).astype(bf)      # (A, H)
    w_log_std = _xavier_uniform(k5, action_dim, hidden_units).astype(bf)   # (A, H)

    w23 = jnp.stack([w2, w3], axis=0)                      # (2, H, H) bf16
    b123 = jnp.zeros((3, hidden_units, 1), jnp.float32)    # b1/b2/b3, lane-0 columns
    wh = jnp.concatenate([w_mean, w_log_std], axis=0)      # (2A, H) bf16
    bh = jnp.zeros((2 * action_dim, 1), jnp.float32)       # (2A, 1)
    return (w1, w23, b123, wh, bh)


if __name__ == "__main__":
    key = jax.random.PRNGKey(0)
    k_params, k_state = jax.random.split(key)

    batch, state_dim, action_dim, hidden_units = 8, 8, 4, 32
    params = init_gaussian_actor_params(k_params, state_dim, action_dim, hidden_units)
    state = jax.random.normal(k_state, (batch, state_dim), jnp.float32)

    mean, std = jax.jit(gaussian_actor_forward)(state, params)
    jax.block_until_ready((mean, std))

    # Pure-JAX reference mirroring the kernel's bf16-operand / f32-accumulate
    # matmuls (same math as GaussianActor.forward in PyTorch, at MXU precision).
    w1, w23, b123, wh, bh = params
    A = action_dim
    f32 = jnp.float32

    def b16(t):  # round-trip through bf16, like the kernel's matmul operands
        return t.astype(jnp.bfloat16).astype(f32)

    h = jnp.maximum(b16(state) @ w1.astype(f32).T + b123[0, :, 0], 0.0)
    h = jnp.maximum(b16(h) @ w23[0].astype(f32).T + b123[1, :, 0], 0.0)
    h = jnp.maximum(b16(h) @ w23[1].astype(f32).T + b123[2, :, 0], 0.0)
    heads = b16(h) @ wh.astype(f32).T + bh[:, 0]
    mean_ref = heads[:, :A]
    std_ref = jnp.exp(jnp.clip(heads[:, A:], LOG_STD_MIN, LOG_STD_MAX))

    assert mean.shape == (batch, action_dim) and std.shape == (batch, action_dim)
    assert bool(jnp.allclose(mean, mean_ref, atol=1e-3, rtol=1e-3))
    assert bool(jnp.allclose(std, std_ref, atol=1e-3, rtol=1e-3))
    assert bool(jnp.all(std > 0.0))

    # TODO(synk): GaussianActor.sample() (Normal.rsample + tanh log-prob) is
    # host-level stochastic glue and intentionally not part of this kernel.
    print("KERNEL_OK")
</pallas_src>

<mosaic_0001>
module attributes {stable_mosaic.version = 11 : i64} {
  func.func @_actor_kernel(%arg0: i32, %arg1: memref<256x8xf32, #tpu.memory_space<vmem>>, %arg2: memref<32x8xbf16, #tpu.memory_space<vmem>>, %arg3: memref<2x32x32xbf16, #tpu.memory_space<vmem>>, %arg4: memref<3x32x1xf32, #tpu.memory_space<vmem>>, %arg5: memref<8x32xbf16, #tpu.memory_space<vmem>>, %arg6: memref<8x1xf32, #tpu.memory_space<vmem>>, %arg7: memref<8x256xf32, #tpu.memory_space<vmem>>) attributes {dimension_semantics = [#tpu.dimension_semantics<parallel>], iteration_bounds = array<i64: 1>, scalar_prefetch = 0 : i64, scratch_operands = 0 : i64, tpu.core_type = #tpu.core_type<tc>, window_params = [{transform_indices = @transform_0, window_bounds = array<i64: 256, 8>}, {pipeline_mode = #tpu.pipeline_mode<synchronous>, transform_indices = @transform_1, window_bounds = array<i64: 32, 8>}, {pipeline_mode = #tpu.pipeline_mode<synchronous>, transform_indices = @transform_2, window_bounds = array<i64: 2, 32, 32>}, {pipeline_mode = #tpu.pipeline_mode<synchronous>, transform_indices = @transform_3, window_bounds = array<i64: 3, 32, 1>}, {pipeline_mode = #tpu.pipeline_mode<synchronous>, transform_indices = @transform_4, window_bounds = array<i64: 8, 32>}, {pipeline_mode = #tpu.pipeline_mode<synchronous>, transform_indices = @transform_5, window_bounds = array<i64: 8, 1>}, {transform_indices = @transform_6, window_bounds = array<i64: 8, 256>}]} {
    %c0 = arith.constant 0 : index
    %c0_0 = arith.constant 0 : index
    %0 = vector.load %arg1[%c0, %c0_0] : memref<256x8xf32, #tpu.memory_space<vmem>>, vector<256x8xf32>
    %1 = arith.truncf %0 : vector<256x8xf32> to vector<256x8xbf16>
    %c0_1 = arith.constant 0 : index
    %c0_2 = arith.constant 0 : index
    %2 = vector.load %arg2[%c0_1, %c0_2] : memref<32x8xbf16, #tpu.memory_space<vmem>>, vector<32x8xbf16>
    %3 = tpu.transpose %1, [1, 0] : vector<256x8xbf16> -> vector<8x256xbf16>
    %cst = arith.constant dense<0.000000e+00> : vector<32x256xf32>
    %4 = tpu.matmul %2, %3, %cst {dimension_numbers = #tpu.dot_dimension_numbers<[1], [0], [0], [1], [0, 0, 1, 1], [], []>} : vector<32x8xbf16>, vector<8x256xbf16>, vector<32x256xf32> -> vector<32x256xf32>
    %c0_3 = arith.constant 0 : index
    %c0_4 = arith.constant 0 : index
    %c0_5 = arith.constant 0 : index
    %5 = vector.load %arg4[%c0_3, %c0_4, %c0_5] : memref<3x32x1xf32, #tpu.memory_space<vmem>>, vector<1x32x1xf32>
    %6 = vector.shape_cast %5 : vector<1x32x1xf32> to vector<32x1xf32>
    %7 = vector.broadcast %6 : vector<32x1xf32> to vector<32x256xf32>
    %8 = arith.addf %4, %7 : vector<32x256xf32>
    %cst_6 = arith.constant 0.000000e+00 : f32
    %9 = vector.broadcast %cst_6 : f32 to vector<32x256xf32>
    %10 = arith.maximumf %8, %9 : vector<32x256xf32>
    %c0_7 = arith.constant 0 : index
    %c0_8 = arith.constant 0 : index
    %c0_9 = arith.constant 0 : index
    %11 = vector.load %arg3[%c0_7, %c0_8, %c0_9] : memref<2x32x32xbf16, #tpu.memory_space<vmem>>, vector<1x32x32xbf16>
    %12 = vector.shape_cast %11 : vector<1x32x32xbf16> to vector<32x32xbf16>
    %13 = arith.truncf %10 : vector<32x256xf32> to vector<32x256xbf16>
    %cst_10 = arith.constant dense<0.000000e+00> : vector<32x256xf32>
    %14 = tpu.matmul %12, %13, %cst_10 {dimension_numbers = #tpu.dot_dimension_numbers<[1], [0], [0], [1], [0, 0, 1, 1], [], []>} : vector<32x32xbf16>, vector<32x256xbf16>, vector<32x256xf32> -> vector<32x256xf32>
    %c1 = arith.constant 1 : index
    %c0_11 = arith.constant 0 : index
    %c0_12 = arith.constant 0 : index
    %15 = vector.load %arg4[%c1, %c0_11, %c0_12] : memref<3x32x1xf32, #tpu.memory_space<vmem>>, vector<1x32x1xf32>
    %16 = vector.shape_cast %15 : vector<1x32x1xf32> to vector<32x1xf32>
    %17 = vector.broadcast %16 : vector<32x1xf32> to vector<32x256xf32>
    %18 = arith.addf %14, %17 : vector<32x256xf32>
    %cst_13 = arith.constant 0.000000e+00 : f32
    %19 = vector.broadcast %cst_13 : f32 to vector<32x256xf32>
    %20 = arith.maximumf %18, %19 : vector<32x256xf32>
    %c1_14 = arith.constant 1 : index
    %c0_15 = arith.constant 0 : index
    %c0_16 = arith.constant 0 : index
    %21 = vector.load %arg3[%c1_14, %c0_15, %c0_16] : memref<2x32x32xbf16, #tpu.memory_space<vmem>>, vector<1x32x32xbf16>
    %22 = vector.shape_cast %21 : vector<1x32x32xbf16> to vector<32x32xbf16>
    %23 = arith.truncf %20 : vector<32x256xf32> to vector<32x256xbf16>
    %cst_17 = arith.constant dense<0.000000e+00> : vector<32x256xf32>
    %24 = tpu.matmul %22, %23, %cst_17 {dimension_numbers = #tpu.dot_dimension_numbers<[1], [0], [0], [1], [0, 0, 1, 1], [], []>} : vector<32x32xbf16>, vector<32x256xbf16>, vector<32x256xf32> -> vector<32x256xf32>
    %c2 = arith.constant 2 : index
    %c0_18 = arith.constant 0 : index
    %c0_19 = arith.constant 0 : index
    %25 = vector.load %arg4[%c2, %c0_18, %c0_19] : memref<3x32x1xf32, #tpu.memory_space<vmem>>, vector<1x32x1xf32>
    %26 = vector.shape_cast %25 : vector<1x32x1xf32> to vector<32x1xf32>
    %27 = vector.broadcast %26 : vector<32x1xf32> to vector<32x256xf32>
    %28 = arith.addf %24, %27 : vector<32x256xf32>
    %cst_20 = arith.constant 0.000000e+00 : f32
    %29 = vector.broadcast %cst_20 : f32 to vector<32x256xf32>
    %30 = arith.maximumf %28, %29 : vector<32x256xf32>
    %c0_21 = arith.constant 0 : index
    %c0_22 = arith.constant 0 : index
    %31 = vector.load %arg5[%c0_21, %c0_22] : memref<8x32xbf16, #tpu.memory_space<vmem>>, vector<8x32xbf16>
    %32 = arith.truncf %30 : vector<32x256xf32> to vector<32x256xbf16>
    %cst_23 = arith.constant dense<0.000000e+00> : vector<8x256xf32>
    %33 = tpu.matmul %31, %32, %cst_23 {dimension_numbers = #tpu.dot_dimension_numbers<[1], [0], [0], [1], [0, 0, 1, 1], [], []>} : vector<8x32xbf16>, vector<32x256xbf16>, vector<8x256xf32> -> vector<8x256xf32>
    %c0_24 = arith.constant 0 : index
    %c0_25 = arith.constant 0 : index
    %34 = vector.load %arg6[%c0_24, %c0_25] : memref<8x1xf32, #tpu.memory_space<vmem>>, vector<8x1xf32>
    %35 = vector.broadcast %34 : vector<8x1xf32> to vector<8x256xf32>
    %36 = arith.addf %33, %35 : vector<8x256xf32>
    %37 = tpu.iota {dimensions = array<i32: 0>} : vector<8x256xi32>
    %cst_26 = arith.constant -2.000000e+01 : f32
    %cst_27 = arith.constant 2.000000e+00 : f32
    %38 = vector.broadcast %cst_26 : f32 to vector<8x256xf32>
    %39 = arith.maximumf %38, %36 : vector<8x256xf32>
    %40 = vector.broadcast %cst_27 : f32 to vector<8x256xf32>
    %41 = arith.minimumf %40, %39 : vector<8x256xf32>
    %42 = math.exp %41 : vector<8x256xf32>
    %c4_i32 = arith.constant 4 : i32
    %43 = vector.broadcast %c4_i32 : i32 to vector<8x256xi32>
    %44 = arith.cmpi sge, %37, %43 : vector<8x256xi32>
    %45 = arith.select %44, %42, %36 : vector<8x256xi1>, vector<8x256xf32>
    %c0_28 = arith.constant 0 : index
    %c0_29 = arith.constant 0 : index
    %46 = vector.load %arg7[%c0_28, %c0_29] : memref<8x256xf32, #tpu.memory_space<vmem>>, vector<8x256xf32>
    tpu.vector_store %arg7[%c0_28, %c0_29], %45 {strides = array<i32>} : memref<8x256xf32, #tpu.memory_space<vmem>>, vector<8x256xf32>,
    return
  }
  func.func @transform_0(%arg0: i32) -> (i32, i32) {
    %c0_i32 = arith.constant 0 : i32
    %c0_i32_0 = arith.constant 0 : i32
    return %arg0, %c0_i32 : i32, i32
  }
  func.func @transform_1(%arg0: i32) -> (i32, i32) {
    %c0_i32 = arith.constant 0 : i32
    %c0_i32_0 = arith.constant 0 : i32
    %c0_i32_1 = arith.constant 0 : i32
    return %c0_i32, %c0_i32_0 : i32, i32
  }
  func.func @transform_2(%arg0: i32) -> (i32, i32, i32) {
    %c0_i32 = arith.constant 0 : i32
    %c0_i32_0 = arith.constant 0 : i32
    %c0_i32_1 = arith.constant 0 : i32
    %c0_i32_2 = arith.constant 0 : i32
    return %c0_i32, %c0_i32_0, %c0_i32_1 : i32, i32, i32
  }
  func.func @transform_3(%arg0: i32) -> (i32, i32, i32) {
    %c0_i32 = arith.constant 0 : i32
    %c0_i32_0 = arith.constant 0 : i32
    %c0_i32_1 = arith.constant 0 : i32
    %c0_i32_2 = arith.constant 0 : i32
    return %c0_i32, %c0_i32_0, %c0_i32_1 : i32, i32, i32
  }
  func.func @transform_4(%arg0: i32) -> (i32, i32) {
    %c0_i32 = arith.constant 0 : i32
    %c0_i32_0 = arith.constant 0 : i32
    %c0_i32_1 = arith.constant 0 : i32
    return %c0_i32, %c0_i32_0 : i32, i32
  }
  func.func @transform_5(%arg0: i32) -> (i32, i32) {
    %c0_i32 = arith.constant 0 : i32
    %c0_i32_0 = arith.constant 0 : i32
    %c0_i32_1 = arith.constant 0 : i32
    return %c0_i32, %c0_i32_0 : i32, i32
  }
  func.func @transform_6(%arg0: i32) -> (i32, i32) {
    %c0_i32 = arith.constant 0 : i32
    %c0_i32_0 = arith.constant 0 : i32
    return %c0_i32, %arg0 : i32, i32
  }
}

</mosaic_0001>

<llo_original>
// kernel: gaussian_actor_forward.1
$region0: #{gaussian_actor_forward.1}
  #allocation0 [shape = 'u32[]', space=smem, size = 0x4, offset = 0x4, fixed_abs, tag = 'smem constant byte address 0x4 - core index']
  #allocation1 [shape = 'u32[72,128]{1,0:T(1,128)}', space=vmem, size = 0x9000, scoped, tag = 'internal scratch']
  %s0 = inlined_call_operand.vmem [shape: f32[256,8], index: 0, kind: input, shape index: {}]
  %s1 = inlined_call_operand.vmem [shape: bf16[32,8], index: 1, kind: input, shape index: {}]
  %s2 = inlined_call_operand.vmem [shape: bf16[2,32,32], index: 2, kind: input, shape index: {}]
  %s3 = inlined_call_operand.vmem [shape: f32[3,32,1], index: 3, kind: input, shape index: {}]
  %s4 = inlined_call_operand.vmem [shape: bf16[8,32], index: 4, kind: input, shape index: {}]
  %s5 = inlined_call_operand.vmem [shape: f32[8,1], index: 5, kind: input, shape index: {}]
  %s6 = inlined_call_operand.vmem [shape: f32[8,256], index: 6, kind: output, shape index: {}]
  %s7 = sld [smem:[#allocation0]]
  $region34: #{gaussian_actor_forward.1} parent=0
    _
  %s9 = ssub.s32 1, %s7
  %s10 = scalar_select 0, %s9, %s7
  // Predicated region
  $region2: #{gaussian_actor_forward.1} parent=0 // pred_check
    _
  $region3: #{gaussian_actor_forward.1} parent=0 // pred_check_branch
    %12 = sbr.rel (0) target = $region5
  $region4: #{gaussian_actor_forward.1} parent=0 // pred_region
    _
  $region5: #{gaussian_actor_forward.1} parent=0 // pred_fallthru
    _
  // Predicated region
  $region6: #{gaussian_actor_forward.1} parent=0 // pred_check
    _
  $region7: #{gaussian_actor_forward.1} parent=0 // pred_check_branch
    %14 = sbr.rel (0) target = $region9
  $region8: #{gaussian_actor_forward.1} parent=0 // pred_region
    _
  $region9: #{gaussian_actor_forward.1} parent=0 // pred_fallthru
    _
  // Predicated region
  $region10: #{gaussian_actor_forward.1} parent=0 // pred_check
    _
  $region11: #{gaussian_actor_forward.1} parent=0 // pred_check_branch
    %16 = sbr.rel (0) target = $region13
  $region12: #{gaussian_actor_forward.1} parent=0 // pred_region
    _
  $region13: #{gaussian_actor_forward.1} parent=0 // pred_fallthru
    _
  // Predicated region
  $region14: #{gaussian_actor_forward.1} parent=0 // pred_check
    _
  $region15: #{gaussian_actor_forward.1} parent=0 // pred_check_branch
    %18 = sbr.rel (0) target = $region17
  $region16: #{gaussian_actor_forward.1} parent=0 // pred_region
    _
  $region17: #{gaussian_actor_forward.1} parent=0 // pred_fallthru
    _
  // Predicated region
  $region18: #{gaussian_actor_forward.1} parent=0 // pred_check
    _
  $region19: #{gaussian_actor_forward.1} parent=0 // pred_check_branch
    %20 = sbr.rel (0) target = $region21
  $region20: #{gaussian_actor_forward.1} parent=0 // pred_region
    _
  $region21: #{gaussian_actor_forward.1} parent=0 // pred_fallthru
    _
  // Predicated region
  $region22: #{gaussian_actor_forward.1} parent=0 // pred_check
    _
  $region23: #{gaussian_actor_forward.1} parent=0 // pred_check_branch
    %22 = sbr.rel (0) target = $region25
  $region24: #{gaussian_actor_forward.1} parent=0 // pred_region
    _
  $region25: #{gaussian_actor_forward.1} parent=0 // pred_fallthru
    _
  %v24 = vld [vmem:[%s0] sm:$0xff]
  %v25 = vld [vmem:[%s0 + $0x8] sm:$0xff]
  %v26 = vld [vmem:[%s0 + $0x10] sm:$0xff]
  %v27 = vld [vmem:[%s0 + $0x18] sm:$0xff]
  %v28 = vld [vmem:[%s0 + $0x20] sm:$0xff]
  %v29 = vld [vmem:[%s0 + $0x28] sm:$0xff]
  %v30 = vld [vmem:[%s0 + $0x30] sm:$0xff]
  %v31 = vld [vmem:[%s0 + $0x38] sm:$0xff]
  %v32 = vld [vmem:[%s0 + $0x40] sm:$0xff]
  %v33 = vld [vmem:[%s0 + $0x48] sm:$0xff]
  %v34 = vld [vmem:[%s0 + $0x50] sm:$0xff]
  %v35 = vld [vmem:[%s0 + $0x58] sm:$0xff]
  %v36 = vld [vmem:[%s0 + $0x60] sm:$0xff]
  %v37 = vld [vmem:[%s0 + $0x68] sm:$0xff]
  %v38 = vld [vmem:[%s0 + $0x70] sm:$0xff]
  %v39 = vld [vmem:[%s0 + $0x78] sm:$0xff]
  %v40 = vld [vmem:[%s0 + $0x80] sm:$0xff]
  %v41 = vld [vmem:[%s0 + $0x88] sm:$0xff]
  %v42 = vld [vmem:[%s0 + $0x90] sm:$0xff]
  %v43 = vld [vmem:[%s0 + $0x98] sm:$0xff]
  %v44 = vld [vmem:[%s0 + $0xa0] sm:$0xff]
  %v45 = vld [vmem:[%s0 + $0xa8] sm:$0xff]
  %v46 = vld [vmem:[%s0 + $0xb0] sm:$0xff]
  %v47 = vld [vmem:[%s0 + $0xb8] sm:$0xff]
  %v48 = vld [vmem:[%s0 + $0xc0] sm:$0xff]
  %v49 = vld [vmem:[%s0 + $0xc8] sm:$0xff]
  %v50 = vld [vmem:[%s0 + $0xd0] sm:$0xff]
  %v51 = vld [vmem:[%s0 + $0xd8] sm:$0xff]
  %v52 = vld [vmem:[%s0 + $0xe0] sm:$0xff]
  %v53 = vld [vmem:[%s0 + $0xe8] sm:$0xff]
  %v54 = vld [vmem:[%s0 + $0xf0] sm:$0xff]
  %v55 = vld [vmem:[%s0 + $0xf8] sm:$0xff]
  %v56 = vpack.c.bf16 %v25, %v24
  %v57 = vpack.c.bf16 %v27, %v26
  %v58 = vpack.c.bf16 %v29, %v28
  %v59 = vpack.c.bf16 %v31, %v30
  %v60 = vpack.c.bf16 %v33, %v32
  %v61 = vpack.c.bf16 %v35, %v34
  %v62 = vpack.c.bf16 %v37, %v36
  %v63 = vpack.c.bf16 %v39, %v38
  %v64 = vpack.c.bf16 %v41, %v40
  %v65 = vpack.c.bf16 %v43, %v42
  %v66 = vpack.c.bf16 %v45, %v44
  %v67 = vpack.c.bf16 %v47, %v46
  %v68 = vpack.c.bf16 %v49, %v48
  %v69 = vpack.c.bf16 %v51, %v50
  %v70 = vpack.c.bf16 %v53, %v52
  %v71 = vpack.c.bf16 %v55, %v54
  %v72 = vld [vmem:[%s1] sm:$0xf]
  %v73 = vld [vmem:[%s1 + $0x4] sm:$0xf]
  %v74 = vld [vmem:[%s1 + $0x8] sm:$0xf]
  %v75 = vld [vmem:[%s1 + $0xc] sm:$0xf]
  %v76 = vld [vmem:[%s3] sm:$0xff]
  %v77 = vld [vmem:[%s3 + $0x8] sm:$0xff]
  %v78 = vld [vmem:[%s3 + $0x10] sm:$0xff]
  %v79 = vld [vmem:[%s3 + $0x18] sm:$0xff]
  %81 = vset.pattern.permute.xlu0 0
  %82 = vperm.xlu0 %81, %v76
  %v83 = vpop.permute.xlu0 %82
  %86 = vset.pattern.permute.xlu0 0
  %87 = vperm.xlu0 %86, %v77
  %v88 = vpop.permute.xlu0 %87
  %91 = vset.pattern.permute.xlu0 0
  %92 = vperm.xlu0 %91, %v78
  %v93 = vpop.permute.xlu0 %92
  %96 = vset.pattern.permute.xlu0 0
  %97 = vperm.xlu0 %96, %v79
  %v98 = vpop.permute.xlu0 %97
  %v104 = vunpack.c.l.b16 %v72
  %v105 = vunpack.c.l.b16 %v73
  %v106 = vunpack.c.l.b16 %v74
  %v107 = vunpack.c.l.b16 %v75
  %v108 = vpack.c.b16 %v105, %v104
  %v109 = vpack.c.b16 %v107, %v106
  %vm110 = vcmask 64512
  %v112 = vsel %vm110, %v108, 0
  %v115 = vsel %vm110, %v109, 0
  %v118 = vsel %vm110, %v56, 0
  %v121 = vsel %vm110, %v57, 0
  %v124 = vsel %vm110, %v58, 0
  %v127 = vsel %vm110, %v59, 0
  %v130 = vsel %vm110, %v60, 0
  %v133 = vsel %vm110, %v61, 0
  %v136 = vsel %vm110, %v62, 0
  %v139 = vsel %vm110, %v63, 0
  %v142 = vsel %vm110, %v64, 0
  %v145 = vsel %vm110, %v65, 0
  %v148 = vsel %vm110, %v66, 0
  %v151 = vsel %vm110, %v67, 0
  %v154 = vsel %vm110, %v68, 0
  %v157 = vsel %vm110, %v69, 0
  %v160 = vsel %vm110, %v70, 0
  %v163 = vsel %vm110, %v71, 0
  %165 = vmatpush.bf16.xpose.msra.mxu0 %v139
  %166 = vmatpush.bf16.xpose.msra.mxu0 %v136
  %167 = vmatpush.bf16.xpose.msra.mxu0 %v133
  %168 = vmatpush.bf16.xpose.msra.mxu0 %v130
  %169 = vmatpush.bf16.xpose.msra.mxu0 %v127
  %170 = vmatpush.bf16.xpose.msra.mxu0 %v124
  %171 = vmatpush.bf16.xpose.msra.mxu0 %v121
  %172 = vmatpush.bf16.xpose.msra.mxu0 %v118
  %173 = vmatmul.bf16.gmra.mxu0 %v112
  %v174 = vpop.f32.mrf.mxu0
  %v175 = vadd.f32 %v83, %v174
  %v176 = vpop.f32.mrf.mxu0
  %v177 = vadd.f32 %v88, %v176
  %178 = vmatmul.bf16.gmra.mxu0 %v115
  %v179 = vpop.f32.mrf.mxu0
  %v180 = vadd.f32 %v93, %v179
  %v181 = vpop.f32.mrf.mxu0
  %v182 = vadd.f32 %v98, %v181
  %183 = vdwg.mxu0
  %184 = vmatpush.bf16.xpose.msra.mxu0 %v163
  %185 = vmatpush.bf16.xpose.msra.mxu0 %v160
  %186 = vmatpush.bf16.xpose.msra.mxu0 %v157
  %187 = vmatpush.bf16.xpose.msra.mxu0 %v154
  %188 = vmatpush.bf16.xpose.msra.mxu0 %v151
  %189 = vmatpush.bf16.xpose.msra.mxu0 %v148
  %190 = vmatpush.bf16.xpose.msra.mxu0 %v145
  %191 = vmatpush.bf16.xpose.msra.mxu0 %v142
  %192 = vmatmul.bf16.gmra.mxu0 %v112
  %v193 = vpop.f32.mrf.mxu0
  %v194 = vadd.f32 %v83, %v193
  %v195 = vpop.f32.mrf.mxu0
  %v196 = vadd.f32 %v88, %v195
  %197 = vmatmul.bf16.gmra.mxu0 %v115
  %v198 = vpop.f32.mrf.mxu0
  %v199 = vadd.f32 %v93, %v198
  %v200 = vpop.f32.mrf.mxu0
  %v201 = vadd.f32 %v98, %v200
  %202 = vdwg.mxu0
  %v203 = vmax.f32 %v175, 0.0
  %v204 = vmax.f32 %v194, 0.0
  %v205 = vmax.f32 %v177, 0.0
  %v206 = vmax.f32 %v196, 0.0
  %v207 = vmax.f32 %v180, 0.0
  %v208 = vmax.f32 %v199, 0.0
  %v209 = vmax.f32 %v182, 0.0
  %v210 = vmax.f32 %v201, 0.0
  %v211 = vld [vmem:[%s2] sm:$0xf]
  %v212 = vld [vmem:[%s2 + $0x4] sm:$0xf]
  %v213 = vld [vmem:[%s2 + $0x8] sm:$0xf]
  %v214 = vld [vmem:[%s2 + $0xc] sm:$0xf]
  %v215 = vpack.c.bf16 %v205, %v203
  %v216 = vpack.c.bf16 %v206, %v204
  %v217 = vpack.c.bf16 %v209, %v207
  %v218 = vpack.c.bf16 %v210, %v208
  %s219 = scalar_lea.vmem %s3, 32
  %v220 = vld [vmem:[%s219] sm:$0xff]
  %v221 = vld [vmem:[%s219 + $0x8] sm:$0xff]
  %v222 = vld [vmem:[%s219 + $0x10] sm:$0xff]
  %v223 = vld [vmem:[%s219 + $0x18] sm:$0xff]
  %225 = vset.pattern.permute.xlu0 0
  %226 = vperm.xlu0 %225, %v220
  %v227 = vpop.permute.xlu0 %226
  %230 = vset.pattern.permute.xlu0 0
  %231 = vperm.xlu0 %230, %v221
  %v232 = vpop.permute.xlu0 %231
  %235 = vset.pattern.permute.xlu0 0
  %236 = vperm.xlu0 %235, %v222
  %v237 = vpop.permute.xlu0 %236
  %240 = vset.pattern.permute.xlu0 0
  %241 = vperm.xlu0 %240, %v223
  %v242 = vpop.permute.xlu0 %241
  %v248 = vunpack.c.l.b16 %v211
  %v249 = vunpack.c.l.b16 %v212
  %v250 = vunpack.c.l.b16 %v213
  %v251 = vunpack.c.l.b16 %v214
  %v252 = vpack.c.b16 %v249, %v248
  %v253 = vpack.c.b16 %v251, %v250
  %vm254 = vcmask 261120
  %v256 = vsel %vm254, %v252, 0
  %v259 = vsel %vm254, %v253, 0
  %261 = vmatpush.bf16.msra.mxu0 0
  %262 = vmatpush.bf16.msra.mxu0 0
  %263 = vmatpush.bf16.msra.mxu0 0
  %264 = vmatpush.bf16.msra.mxu0 0
  %265 = vmatpush.bf16.msra.mxu0 0
  %266 = vmatpush.bf16.msra.mxu0 0
  %267 = vmatpush.bf16.msra.mxu0 %v217
  %268 = vmatpush.bf16.msra.mxu0 %v215
  %269 = vmatmul.bf16.gmra.mxu0 %v256
  %v270 = vpop.f32.mrf.mxu0
  %v271 = vadd.f32 %v227, %v270
  %v272 = vpop.f32.mrf.mxu0
  %v273 = vadd.f32 %v232, %v272
  %274 = vmatmul.bf16.gmra.mxu0 %v259
  %v275 = vpop.f32.mrf.mxu0
  %v276 = vadd.f32 %v237, %v275
  %v277 = vpop.f32.mrf.mxu0
  %v278 = vadd.f32 %v242, %v277
  %279 = vdwg.mxu0
  %280 = vmatpush.bf16.msra.mxu0 0
  %281 = vmatpush.bf16.msra.mxu0 0
  %282 = vmatpush.bf16.msra.mxu0 0
  %283 = vmatpush.bf16.msra.mxu0 0
  %284 = vmatpush.bf16.msra.mxu0 0
  %285 = vmatpush.bf16.msra.mxu0 0
  %286 = vmatpush.bf16.msra.mxu0 %v218
  %287 = vmatpush.bf16.msra.mxu0 %v216
  %288 = vmatmul.bf16.gmra.mxu0 %v256
  %v289 = vpop.f32.mrf.mxu0
  %v290 = vadd.f32 %v227, %v289
  %v291 = vpop.f32.mrf.mxu0
  %v292 = vadd.f32 %v232, %v291
  %293 = vmatmul.bf16.gmra.mxu0 %v259
  %v294 = vpop.f32.mrf.mxu0
  %v295 = vadd.f32 %v237, %v294
  %v296 = vpop.f32.mrf.mxu0
  %v297 = vadd.f32 %v242, %v296
  %298 = vdwg.mxu0
  %v299 = vmax.f32 %v271, 0.0
  %v300 = vmax.f32 %v290, 0.0
  %v301 = vmax.f32 %v273, 0.0
  %v302 = vmax.f32 %v292, 0.0
  %v303 = vmax.f32 %v276, 0.0
  %v304 = vmax.f32 %v295, 0.0
  %v305 = vmax.f32 %v278, 0.0
  %v306 = vmax.f32 %v297, 0.0
  %s307 = scalar_lea.vmem %s2, 16
  %v308 = vld [vmem:[%s307] sm:$0xf]
  %v309 = vld [vmem:[%s307 + $0x4] sm:$0xf]
  %v310 = vld [vmem:[%s307 + $0x8] sm:$0xf]
  %v311 = vld [vmem:[%s307 + $0xc] sm:$0xf]
  %v312 = vpack.c.bf16 %v301, %v299
  %v313 = vpack.c.bf16 %v302, %v300
  %v314 = vpack.c.bf16 %v305, %v303
  %v315 = vpack.c.bf16 %v306, %v304
  %s316 = scalar_lea.vmem %s3, 64
  %v317 = vld [vmem:[%s316] sm:$0xff]
  %v318 = vld [vmem:[%s316 + $0x8] sm:$0xff]
  %v319 = vld [vmem:[%s316 + $0x10] sm:$0xff]
  %v320 = vld [vmem:[%s316 + $0x18] sm:$0xff]
  %322 = vset.pattern.permute.xlu0 0
  %323 = vperm.xlu0 %322, %v317
  %v324 = vpop.permute.xlu0 %323
  %327 = vset.pattern.permute.xlu0 0
  %328 = vperm.xlu0 %327, %v318
  %v329 = vpop.permute.xlu0 %328
  %332 = vset.pattern.permute.xlu0 0
  %333 = vperm.xlu0 %332, %v319
  %v334 = vpop.permute.xlu0 %333
  %337 = vset.pattern.permute.xlu0 0
  %338 = vperm.xlu0 %337, %v320
  %v339 = vpop.permute.xlu0 %338
  %v345 = vunpack.c.l.b16 %v308
  %v346 = vunpack.c.l.b16 %v309
  %v347 = vunpack.c.l.b16 %v310
  %v348 = vunpack.c.l.b16 %v311
  %v349 = vpack.c.b16 %v346, %v345
  %v350 = vpack.c.b16 %v348, %v347
  %v352 = vsel %vm254, %v349, 0
  %v355 = vsel %vm254, %v350, 0
  %357 = vmatpush.bf16.msra.mxu0 0
  %358 = vmatpush.bf16.msra.mxu0 0
  %359 = vmatpush.bf16.msra.mxu0 0
  %360 = vmatpush.bf16.msra.mxu0 0
  %361 = vmatpush.bf16.msra.mxu0 0
  %362 = vmatpush.bf16.msra.mxu0 0
  %363 = vmatpush.bf16.msra.mxu0 %v314
  %364 = vmatpush.bf16.msra.mxu0 %v312
  %365 = vmatmul.bf16.gmra.mxu0 %v352
  %v366 = vpop.f32.mrf.mxu0
  %v367 = vadd.f32 %v324, %v366
  %v368 = vpop.f32.mrf.mxu0
  %v369 = vadd.f32 %v329, %v368
  %370 = vmatmul.bf16.gmra.mxu0 %v355
  %v371 = vpop.f32.mrf.mxu0
  %v372 = vadd.f32 %v334, %v371
  %v373 = vpop.f32.mrf.mxu0
  %v374 = vadd.f32 %v339, %v373
  %375 = vdwg.mxu0
  %376 = vmatpush.bf16.msra.mxu0 0
  %377 = vmatpush.bf16.msra.mxu0 0
  %378 = vmatpush.bf16.msra.mxu0 0
  %379 = vmatpush.bf16.msra.mxu0 0
  %380 = vmatpush.bf16.msra.mxu0 0
  %381 = vmatpush.bf16.msra.mxu0 0
  %382 = vmatpush.bf16.msra.mxu0 %v315
  %383 = vmatpush.bf16.msra.mxu0 %v313
  %384 = vmatmul.bf16.gmra.mxu0 %v352
  %v385 = vpop.f32.mrf.mxu0
  %v386 = vadd.f32 %v324, %v385
  %v387 = vpop.f32.mrf.mxu0
  %v388 = vadd.f32 %v329, %v387
  %389 = vmatmul.bf16.gmra.mxu0 %v355
  %v390 = vpop.f32.mrf.mxu0
  %v391 = vadd.f32 %v334, %v390
  %v392 = vpop.f32.mrf.mxu0
  %v393 = vadd.f32 %v339, %v392
  %394 = vdwg.mxu0
  %v395 = vmax.f32 %v367, 0.0
  %v396 = vmax.f32 %v386, 0.0
  %v397 = vmax.f32 %v369, 0.0
  %v398 = vmax.f32 %v388, 0.0
  %v399 = vmax.f32 %v372, 0.0
  %v400 = vmax.f32 %v391, 0.0
  %v401 = vmax.f32 %v374, 0.0
  %v402 = vmax.f32 %v393, 0.0
  %v403 = vld [vmem:[%s4] sm:$0xf]
  %v404 = vpack.c.bf16 %v397, %v395
  %v405 = vpack.c.bf16 %v398, %v396
  %v406 = vpack.c.bf16 %v401, %v399
  %v407 = vpack.c.bf16 %v402, %v400
  %v408 = vld [vmem:[%s5] sm:$0xff]
  %410 = vset.pattern.permute.xlu0 0
  %411 = vperm.xlu0 %410, %v408
  %v412 = vpop.permute.xlu0 %411
  %v415 = vsel %vm254, %v403, 0
  %417 = vmatpush.bf16.msra.mxu0 0
  %418 = vmatpush.bf16.msra.mxu0 0
  %419 = vmatpush.bf16.msra.mxu0 0
  %420 = vmatpush.bf16.msra.mxu0 0
  %421 = vmatpush.bf16.msra.mxu0 0
  %422 = vmatpush.bf16.msra.mxu0 0
  %423 = vmatpush.bf16.msra.mxu0 %v406
  %424 = vmatpush.bf16.msra.mxu0 %v404
  %425 = vmatmul.bf16.gmra.mxu0 %v415
  %v426 = vpop.f32.mrf.mxu0
  %v427 = vadd.f32 %v412, %v426
  %v428 = vpop.f32.mrf.mxu0
  %429 = vdwg.mxu0
  %430 = vmatpush.bf16.msra.mxu0 0
  %431 = vmatpush.bf16.msra.mxu0 0
  %432 = vmatpush.bf16.msra.mxu0 0
  %433 = vmatpush.bf16.msra.mxu0 0
  %434 = vmatpush.bf16.msra.mxu0 0
  %435 = vmatpush.bf16.msra.mxu0 0
  %436 = vmatpush.bf16.msra.mxu0 %v407
  %437 = vmatpush.bf16.msra.mxu0 %v405
  %438 = vmatmul.bf16.gmra.mxu0 %v415
  %v439 = vpop.f32.mrf.mxu0
  %v440 = vadd.f32 %v412, %v439
  %v441 = vpop.f32.mrf.mxu0
  %442 = vdwg.mxu0
  %v443 = vlaneseq
  %v444 = vshrl.u32 %v443, 7
  %v445 = vmax.f32 %v427, -20.0
  %v446 = vmax.f32 %v440, -20.0
  %v447 = vmin.f32 %v445, 2.0
  %v448 = vmin.f32 %v446, 2.0
  %v449 = vmul.f32 %v447, 1.442695
  %v450 = vpow.pop %v449
  %v451 = vmul.f32 %v448, 1.442695
  %v452 = vpow.pop %v451
  %vm453 = vcmp.ge.s32.totalorder %v444, 4
  %v454 = vsel %vm453, %v450, %v427
  %v455 = vsel %vm453, %v452, %v440
  %456 = vst [vmem:[%s6] sm:$0xff] %v454
  %457 = vst [vmem:[%s6 + $0x8] sm:$0xff] %v455
  // Predicated region
  $region26: #{gaussian_actor_forward.1} parent=0 // pred_check
    _
  $region27: #{gaussian_actor_forward.1} parent=0 // pred_check_branch
    %459 = sbr.rel (0) target = $region29
  $region28: #{gaussian_actor_forward.1} parent=0 // pred_region
    _
  $region29: #{gaussian_actor_forward.1} parent=0 // pred_fallthru
    _
  // Predicated region
  $region30: #{gaussian_actor_forward.1} parent=0 // pred_check
    _
  $region31: #{gaussian_actor_forward.1} parent=0 // pred_check_branch
    %461 = sbr.rel (0) target = $region33
  $region32: #{gaussian_actor_forward.1} parent=0 // pred_region
    _
  $region33: #{gaussian_actor_forward.1} parent=0 // pred_fallthru
    _

</llo_original>
